<compile_context>
chip_gen: v7x
topology: tpu7x:2x2x1
jax: 0.10.0
libtpu: 0.0.40
codegen_flags: <defaults>
</compile_context>

<pallas_src>
import math
from functools import partial

import jax
import jax.numpy as jnp
import numpy as np
from jax.experimental import pallas as pl
from jax.experimental.pallas import tpu as pltpu


# ---------------------------------------------------------------------------
# Pallas kernel: full Relation forward on one batch tile.
# ---------------------------------------------------------------------------
def _relation_kernel(x_ref, m1_ref, m2_ref, fw1_ref, fw2_ref, bias_ref, out_ref,
                     *, L1, L2, R):
    """x_ref: (TB, Cin*H*W) NCHW-flattened inputs (m1's rows match that order).
    m1/m2: lowered conv matrices (output columns in pooling-phase-major order).
    bias_ref rows: 0 = conv1 bias (tiled), 1 = conv2 bias (tiled),
                   2 = fc1 bias, 3 = fc2 bias.
    L1 = (H/2)*(W/2)*C1 (per-phase width after conv1), L2 = C2, R = relation_dim.
    """
    # MXU operands in bf16, accumulation in f32; elementwise stays f32.
    x = x_ref[...].astype(jnp.bfloat16)

    # conv1 (+ folded BatchNorm + bias) as one matmul, ReLU, MaxPool2d(2).
    a1 = jnp.dot(x, m1_ref[...], preferred_element_type=jnp.float32)
    a1 = jnp.maximum(a1 + bias_ref[0:1, :4 * L1], 0.0)
    p1 = jnp.maximum(jnp.maximum(a1[:, 0:L1], a1[:, L1:2 * L1]),
                     jnp.maximum(a1[:, 2 * L1:3 * L1], a1[:, 3 * L1:4 * L1]))

    # conv2 (+ folded BatchNorm + bias), ReLU, MaxPool2d(2)  ->  (TB, C2).
    a2 = jnp.dot(p1.astype(jnp.bfloat16), m2_ref[...],
                 preferred_element_type=jnp.float32)
    a2 = jnp.maximum(a2 + bias_ref[1:2, :4 * L2], 0.0)
    p2 = jnp.maximum(jnp.maximum(a2[:, 0:L2], a2[:, L2:2 * L2]),
                     jnp.maximum(a2[:, 2 * L2:3 * L2], a2[:, 3 * L2:4 * L2]))

    # fc1 + ReLU (Dropout is identity in eval), fc2 + sigmoid.
    h = jnp.dot(p2.astype(jnp.bfloat16), fw1_ref[...],
                preferred_element_type=jnp.float32) + bias_ref[2:3, :R]
    h = jnp.maximum(h, 0.0)
    y = jnp.dot(h.astype(jnp.bfloat16), fw2_ref[...],
                preferred_element_type=jnp.float32) + bias_ref[3:4, 0:1]
    out_ref[...] = jax.nn.sigmoid(y)


# ---------------------------------------------------------------------------
# Init-time parameter lowering (plain host/JAX glue, no per-input compute).
# ---------------------------------------------------------------------------
def _lower_conv3x3(w_nhwc, H, W, in_order):
    """Lower a 3x3 / pad=1 conv into a dense (H*W*Cin, H*W*Cout) matrix M so
    that  flat_in(x) @ M == flat_out(conv(x)), with:

      * input rows ordered 'nchw'  (row = ci*H*W + hi*W + wi)   or
                           'nhwc'  (row = (hi*W + wi)*Cin + ci);
      * output columns ordered pooling-phase-major NHWC:
            col = (phase*(H/2)*(W/2) + (ho//2)*(W/2) + (wo//2)) * Cout + co,
            phase = (ho % 2)*2 + (wo % 2),
        so a following MaxPool2d(2) is an elementwise max of 4 contiguous lane
        slices and the pooled result is NHWC-flat for the next stage.
    """
    w = np.asarray(w_nhwc, dtype=np.float32)              # (3, 3, Cin, Cout)
    Cin, Cout = w.shape[2], w.shape[3]
    H2, W2 = H // 2, W // 2
    M = np.zeros((H * W * Cin, H * W * Cout), np.float32)
    for ho in range(H):
        for wo in range(W):
            ph = (ho % 2) * 2 + (wo % 2)
            col = (ph * H2 * W2 + (ho // 2) * W2 + (wo // 2)) * Cout
            for dh in range(3):
                for dw in range(3):
                    hi, wi = ho + dh - 1, wo + dw - 1
                    if not (0 <= hi < H and 0 <= wi < W):
                        continue
                    if in_order == "nchw":
                        rows = np.arange(Cin) * (H * W) + hi * W + wi
                    else:
                        rows = (hi * W + wi) * Cin + np.arange(Cin)
                    M[rows, col:col + Cout] = w[dh, dw]
    return M


def init_params(key, feature_size, hidden_size, relation_dim, spatial=(4, 4)):
    """Deterministic init mirroring the PyTorch module, then folded/lowered."""
    H, W = spatial
    # Two MaxPool2d(2) stages must reduce the map to 1x1 so the flatten feeds
    # Linear(hidden_size[1], ...) exactly.
    assert H == 4 and W == 4, "Relation's fc requires a 4x4 input feature map"
    cin = feature_size * 2
    c1, c2 = hidden_size
    eps = 1e-5
    k1, k2, k3, k4 = jax.random.split(key, 4)

    # Conv2d: PyTorch weight (out,in,3,3) ~ N(0, sqrt(2/(9*out))), bias = 0.
    w1_t = jax.random.normal(k1, (c1, cin, 3, 3), jnp.float32) * math.sqrt(2.0 / (9 * c1))
    w2_t = jax.random.normal(k2, (c2, c1, 3, 3), jnp.float32) * math.sqrt(2.0 / (9 * c2))
    b1 = jnp.zeros((c1,), jnp.float32)
    b2 = jnp.zeros((c2,), jnp.float32)

    # BatchNorm2d eval (gamma=1, beta=0, running mean/var = 0/1) folded into
    # the conv:  y = (conv(x) + b) * s + t  with  s = gamma/sqrt(var+eps).
    def bn_fold(gamma, beta, mean, var):
        s = gamma / jnp.sqrt(var + eps)
        return s, beta - mean * s

    s1, t1 = bn_fold(jnp.ones((c1,)), jnp.zeros((c1,)), jnp.zeros((c1,)), jnp.ones((c1,)))
    s2, t2 = bn_fold(jnp.ones((c2,)), jnp.zeros((c2,)), jnp.zeros((c2,)), jnp.ones((c2,)))

    w1 = jnp.transpose(w1_t, (2, 3, 1, 0)) * s1            # (3,3,cin,c1), BN-scaled
    w2 = jnp.transpose(w2_t, (2, 3, 1, 0)) * s2
    b1f = b1 * s1 + t1
    b2f = b2 * s2 + t2

    # Dense lowered conv matrices. conv1 uses NCHW row order so the wrapper
    # can feed the NCHW input with a free reshape; conv1's pooled output is
    # NHWC-flat, so conv2 uses NHWC row order. Stored bf16 (MXU operands).
    m1 = jnp.asarray(_lower_conv3x3(np.asarray(w1), H, W, "nchw"), jnp.bfloat16)
    m2 = jnp.asarray(_lower_conv3x3(np.asarray(w2), H // 2, W // 2, "nhwc"),
                     jnp.bfloat16)

    # Linear: weight (out,in) ~ N(0, 0.01), bias = ones.
    fw1_raw = jax.random.normal(k3, (relation_dim, c2), jnp.float32) * 0.01
    fw2_raw = jax.random.normal(k4, (1, relation_dim), jnp.float32) * 0.01
    fb1 = jnp.ones((relation_dim,), jnp.float32)
    fb2 = jnp.ones((1,), jnp.float32)

    # Pack all small bias vectors into one f32 VMEM operand.
    bias1 = jnp.tile(b1f, H * W)                            # (H*W*c1,)
    bias2 = jnp.tile(b2f, (H // 2) * (W // 2))              # (H/2*W/2*c2,)
    wp = max(int(bias1.shape[0]), int(bias2.shape[0]), relation_dim, 128)
    pack = jnp.zeros((4, wp), jnp.float32)
    pack = pack.at[0, :bias1.shape[0]].set(bias1)
    pack = pack.at[1, :bias2.shape[0]].set(bias2)
    pack = pack.at[2, :relation_dim].set(fb1)
    pack = pack.at[3, :1].set(fb2)

    return dict(m1=m1, m2=m2,
                fw1=fw1_raw.T.astype(jnp.bfloat16),
                fw2=fw2_raw.T.astype(jnp.bfloat16),
                bias_pack=pack,
                H=H, W=W, cin=cin, c1=c1, c2=c2, R=relation_dim,
                _raw=dict(w1=w1_t, b1=b1, w2=w2_t, b2=b2,
                          fw1=fw1_raw, fb1=fb1, fw2=fw2_raw, fb2=fb2))


# ---------------------------------------------------------------------------
# Wrapper: layout plumbing + pallas_call.
# ---------------------------------------------------------------------------
def _pick_batch_tile(B, max_tb):
    """Large batch tile to amortize the ~600-cycle per-step overhead, but keep
    >= 2 grid steps once the batch is big enough (v7x megacore sharding).
    Ragged tails are handled by Pallas partial-block masking (no padding)."""
    if B <= min(512, max_tb):
        return B                                   # single exact step
    half = (((B + 1) // 2) + 7) // 8 * 8           # ~B/2, multiple of 8
    return max(8, min(max_tb, half, B))


def relation_forward(feature_nchw, params, max_tb=1024):
    """feature_nchw: (B, 2*feature_size, H, W), same layout as the PyTorch module."""
    H, W = params["H"], params["W"]
    cin, c1, c2, R = params["cin"], params["c1"], params["c2"], params["R"]
    B = feature_nchw.shape[0]
    assert feature_nchw.shape == (B, cin, H, W)

    # m1's rows are NCHW-ordered, so flattening the NCHW input is a free
    # reshape (no XLA transpose / extra HBM pass). The bf16 cast for the MXU
    # happens inside the kernel, so x is read from HBM exactly once.
    x = feature_nchw.reshape(B, cin * H * W)

    tb = _pick_batch_tile(B, max_tb)
    grid = (pl.cdiv(B, tb),)

    L1 = (H // 2) * (W // 2) * c1        # per-phase width after conv1
    L2 = (H // 4) * (W // 4) * c2        # per-phase width after conv2 (= c2)
    kernel = partial(_relation_kernel, L1=L1, L2=L2, R=R)

    m1, m2 = params["m1"], params["m2"]
    fw1, fw2, pack = params["fw1"], params["fw2"], params["bias_pack"]

    return pl.pallas_call(
        kernel,
        grid=grid,
        in_specs=[
            pl.BlockSpec((tb, cin * H * W), lambda i: (i, 0)),
            pl.BlockSpec(m1.shape, lambda i: (0, 0)),
            pl.BlockSpec(m2.shape, lambda i: (0, 0)),
            pl.BlockSpec(fw1.shape, lambda i: (0, 0)),
            pl.BlockSpec(fw2.shape, lambda i: (0, 0)),
            pl.BlockSpec(pack.shape, lambda i: (0, 0)),
        ],
        out_specs=pl.BlockSpec((tb, 1), lambda i: (i, 0)),
        out_shape=jax.ShapeDtypeStruct((B, 1), jnp.float32),
        compiler_params=pltpu.CompilerParams(
            dimension_semantics=("parallel",)),
    )(x, m1, m2, fw1, fw2, pack)


# ---------------------------------------------------------------------------
# Pure-JAX reference (test-only; mirrors the PyTorch eval-mode forward).
# ---------------------------------------------------------------------------
def _reference_forward(feature_nchw, raw, eps=1e-5):
    hp = jax.lax.Precision.HIGHEST

    def conv3x3(x, w_oihw, b):
        Bn, Cn, Hh, Ww = x.shape
        xp = jnp.pad(x, ((0, 0), (0, 0), (1, 1), (1, 1)))
        out = jnp.zeros((Bn, w_oihw.shape[0], Hh, Ww), jnp.float32)
        for dh in range(3):
            for dw in range(3):
                patch = xp[:, :, dh:dh + Hh, dw:dw + Ww]
                out = out + jnp.einsum("bchw,oc->bohw", patch,
                                       w_oihw[:, :, dh, dw], precision=hp)
        return out + b.reshape(1, -1, 1, 1)

    def block(x, w, b):
        y = conv3x3(x, w, b) / jnp.sqrt(1.0 + eps)          # BN eval fold
        y = jnp.maximum(y, 0.0)
        Bn, Cn, Hh, Ww = y.shape
        return y.reshape(Bn, Cn, Hh // 2, 2, Ww // 2, 2).max(axis=(3, 5))

    y = block(feature_nchw.astype(jnp.float32), raw["w1"], raw["b1"])
    y = block(y, raw["w2"], raw["b2"])
    y = y.reshape(y.shape[0], -1)
    y = jnp.maximum(jnp.dot(y, raw["fw1"].T, precision=hp) + raw["fb1"], 0.0)
    y = jnp.dot(y, raw["fw2"].T, precision=hp) + raw["fb2"]
    return jax.nn.sigmoid(y)


if __name__ == "__main__":
    key = jax.random.PRNGKey(0)
    feature_size = 4
    hidden_size = (8, 8)
    relation_dim = 8
    B, H, W = 2, 4, 4   # fc expects a 1x1 map after two MaxPool2d(2) stages

    kx, kp, kx2 = jax.random.split(key, 3)
    feature = jax.random.normal(kx, (B, feature_size * 2, H, W), jnp.float32)  # NCHW
    params = init_params(kp, feature_size, hidden_size, relation_dim, spatial=(H, W))

    out = jax.block_until_ready(relation_forward(feature, params))
    assert out.shape == (B, 1)
    assert bool(jnp.all((out >= 0.0) & (out <= 1.0)))

    ref = _reference_forward(feature, params["_raw"])
    assert bool(jnp.allclose(out, ref, atol=5e-3, rtol=5e-3)), (out, ref)

    # Multi-step grid with a ragged last block (exercises partial-block masking
    # and the "parallel" batch axis) — still small shapes.
    B2 = 160
    feature2 = jax.random.normal(kx2, (B2, feature_size * 2, H, W), jnp.float32)
    out2 = jax.block_until_ready(relation_forward(feature2, params, max_tb=64))
    assert out2.shape == (B2, 1)
    ref2 = _reference_forward(feature2, params["_raw"])
    assert bool(jnp.allclose(out2, ref2, atol=5e-3, rtol=5e-3))

    print("KERNEL_OK")
</pallas_src>

<mosaic_0001>
module attributes {stable_mosaic.version = 11 : i64} {
  func.func @_relation_kernel(%arg0: i32, %arg1: memref<2x128xf32, #tpu.memory_space<vmem>>, %arg2: memref<128x128xbf16, #tpu.memory_space<vmem>>, %arg3: memref<32x32xbf16, #tpu.memory_space<vmem>>, %arg4: memref<8x8xbf16, #tpu.memory_space<vmem>>, %arg5: memref<8x1xbf16, #tpu.memory_space<vmem>>, %arg6: memref<4x128xf32, #tpu.memory_space<vmem>>, %arg7: memref<2x1xf32, #tpu.memory_space<vmem>>) attributes {dimension_semantics = [#tpu.dimension_semantics<parallel>], iteration_bounds = array<i64: 1>, scalar_prefetch = 0 : i64, scratch_operands = 0 : i64, tpu.core_type = #tpu.core_type<tc>, window_params = [{transform_indices = @transform_0, window_bounds = array<i64: 2, 128>}, {pipeline_mode = #tpu.pipeline_mode<synchronous>, transform_indices = @transform_1, window_bounds = array<i64: 128, 128>}, {pipeline_mode = #tpu.pipeline_mode<synchronous>, transform_indices = @transform_2, window_bounds = array<i64: 32, 32>}, {pipeline_mode = #tpu.pipeline_mode<synchronous>, transform_indices = @transform_3, window_bounds = array<i64: 8, 8>}, {pipeline_mode = #tpu.pipeline_mode<synchronous>, transform_indices = @transform_4, window_bounds = array<i64: 8, 1>}, {pipeline_mode = #tpu.pipeline_mode<synchronous>, transform_indices = @transform_5, window_bounds = array<i64: 4, 128>}, {transform_indices = @transform_6, window_bounds = array<i64: 2, 1>}]} {
    %c0 = arith.constant 0 : index
    %c0_0 = arith.constant 0 : index
    %0 = vector.load %arg1[%c0, %c0_0] : memref<2x128xf32, #tpu.memory_space<vmem>>, vector<2x128xf32>
    %1 = arith.truncf %0 : vector<2x128xf32> to vector<2x128xbf16>
    %c0_1 = arith.constant 0 : index
    %c0_2 = arith.constant 0 : index
    %2 = vector.load %arg2[%c0_1, %c0_2] : memref<128x128xbf16, #tpu.memory_space<vmem>>, vector<128x128xbf16>
    %cst = arith.constant dense<0.000000e+00> : vector<2x128xf32>
    %3 = tpu.matmul %1, %2, %cst {dimension_numbers = #tpu.dot_dimension_numbers<[1], [0], [0], [1], [0, 0, 1, 1], [], []>} : vector<2x128xbf16>, vector<128x128xbf16>, vector<2x128xf32> -> vector<2x128xf32>
    %c0_3 = arith.constant 0 : index
    %c0_4 = arith.constant 0 : index
    %4 = vector.load %arg6[%c0_3, %c0_4] : memref<4x128xf32, #tpu.memory_space<vmem>>, vector<1x128xf32>
    %5 = vector.broadcast %4 : vector<1x128xf32> to vector<2x128xf32>
    %6 = arith.addf %3, %5 : vector<2x128xf32>
    %cst_5 = arith.constant 0.000000e+00 : f32
    %7 = vector.broadcast %cst_5 : f32 to vector<2x128xf32>
    %8 = arith.maximumf %6, %7 : vector<2x128xf32>
    %9 = vector.extract_strided_slice %8 {offsets = [0, 0], sizes = [2, 32], strides = [1, 1]} : vector<2x128xf32> to vector<2x32xf32>
    %10 = vector.extract_strided_slice %8 {offsets = [0, 32], sizes = [2, 32], strides = [1, 1]} : vector<2x128xf32> to vector<2x32xf32>
    %11 = arith.maximumf %9, %10 : vector<2x32xf32>
    %12 = vector.extract_strided_slice %8 {offsets = [0, 64], sizes = [2, 32], strides = [1, 1]} : vector<2x128xf32> to vector<2x32xf32>
    %13 = vector.extract_strided_slice %8 {offsets = [0, 96], sizes = [2, 32], strides = [1, 1]} : vector<2x128xf32> to vector<2x32xf32>
    %14 = arith.maximumf %12, %13 : vector<2x32xf32>
    %15 = arith.maximumf %11, %14 : vector<2x32xf32>
    %16 = arith.truncf %15 : vector<2x32xf32> to vector<2x32xbf16>
    %c0_6 = arith.constant 0 : index
    %c0_7 = arith.constant 0 : index
    %17 = vector.load %arg3[%c0_6, %c0_7] : memref<32x32xbf16, #tpu.memory_space<vmem>>, vector<32x32xbf16>
    %cst_8 = arith.constant dense<0.000000e+00> : vector<2x32xf32>
    %18 = tpu.matmul %16, %17, %cst_8 {dimension_numbers = #tpu.dot_dimension_numbers<[1], [0], [0], [1], [0, 0, 1, 1], [], []>} : vector<2x32xbf16>, vector<32x32xbf16>, vector<2x32xf32> -> vector<2x32xf32>
    %c1 = arith.constant 1 : index
    %c0_9 = arith.constant 0 : index
    %19 = vector.load %arg6[%c1, %c0_9] : memref<4x128xf32, #tpu.memory_space<vmem>>, vector<1x32xf32>
    %20 = vector.broadcast %19 : vector<1x32xf32> to vector<2x32xf32>
    %21 = arith.addf %18, %20 : vector<2x32xf32>
    %cst_10 = arith.constant 0.000000e+00 : f32
    %22 = vector.broadcast %cst_10 : f32 to vector<2x32xf32>
    %23 = arith.maximumf %21, %22 : vector<2x32xf32>
    %24 = vector.extract_strided_slice %23 {offsets = [0, 0], sizes = [2, 8], strides = [1, 1]} : vector<2x32xf32> to vector<2x8xf32>
    %25 = vector.extract_strided_slice %23 {offsets = [0, 8], sizes = [2, 8], strides = [1, 1]} : vector<2x32xf32> to vector<2x8xf32>
    %26 = arith.maximumf %24, %25 : vector<2x8xf32>
    %27 = vector.extract_strided_slice %23 {offsets = [0, 16], sizes = [2, 8], strides = [1, 1]} : vector<2x32xf32> to vector<2x8xf32>
    %28 = vector.extract_strided_slice %23 {offsets = [0, 24], sizes = [2, 8], strides = [1, 1]} : vector<2x32xf32> to vector<2x8xf32>
    %29 = arith.maximumf %27, %28 : vector<2x8xf32>
    %30 = arith.maximumf %26, %29 : vector<2x8xf32>
    %31 = arith.truncf %30 : vector<2x8xf32> to vector<2x8xbf16>
    %c0_11 = arith.constant 0 : index
    %c0_12 = arith.constant 0 : index
    %32 = vector.load %arg4[%c0_11, %c0_12] : memref<8x8xbf16, #tpu.memory_space<vmem>>, vector<8x8xbf16>
    %cst_13 = arith.constant dense<0.000000e+00> : vector<2x8xf32>
    %33 = tpu.matmul %31, %32, %cst_13 {dimension_numbers = #tpu.dot_dimension_numbers<[1], [0], [0], [1], [0, 0, 1, 1], [], []>} : vector<2x8xbf16>, vector<8x8xbf16>, vector<2x8xf32> -> vector<2x8xf32>
    %c2 = arith.constant 2 : index
    %c0_14 = arith.constant 0 : index
    %34 = vector.load %arg6[%c2, %c0_14] : memref<4x128xf32, #tpu.memory_space<vmem>>, vector<1x8xf32>
    %35 = vector.broadcast %34 : vector<1x8xf32> to vector<2x8xf32>
    %36 = arith.addf %33, %35 : vector<2x8xf32>
    %cst_15 = arith.constant 0.000000e+00 : f32
    %37 = vector.broadcast %cst_15 : f32 to vector<2x8xf32>
    %38 = arith.maximumf %36, %37 : vector<2x8xf32>
    %39 = arith.truncf %38 : vector<2x8xf32> to vector<2x8xbf16>
    %c0_16 = arith.constant 0 : index
    %c0_17 = arith.constant 0 : index
    %40 = vector.load %arg5[%c0_16, %c0_17] : memref<8x1xbf16, #tpu.memory_space<vmem>>, vector<8x1xbf16>
    %cst_18 = arith.constant dense<0.000000e+00> : vector<2x1xf32>
    %41 = tpu.matmul %39, %40, %cst_18 {dimension_numbers = #tpu.dot_dimension_numbers<[1], [0], [0], [1], [0, 0, 1, 1], [], []>} : vector<2x8xbf16>, vector<8x1xbf16>, vector<2x1xf32> -> vector<2x1xf32>
    %c3 = arith.constant 3 : index
    %c0_19 = arith.constant 0 : index
    %42 = vector.load %arg6[%c3, %c0_19] : memref<4x128xf32, #tpu.memory_space<vmem>>, vector<1x1xf32>
    %43 = vector.broadcast %42 : vector<1x1xf32> to vector<2x1xf32>
    %44 = arith.addf %41, %43 : vector<2x1xf32>
    %45 = arith.negf %44 : vector<2x1xf32>
    %46 = math.exp %45 : vector<2x1xf32>
    %cst_20 = arith.constant 1.000000e+00 : f32
    %47 = vector.broadcast %cst_20 : f32 to vector<2x1xf32>
    %48 = arith.addf %47, %46 : vector<2x1xf32>
    %49 = arith.divf %47, %48 : vector<2x1xf32>
    %c0_21 = arith.constant 0 : index
    %c0_22 = arith.constant 0 : index
    %50 = vector.load %arg7[%c0_21, %c0_22] : memref<2x1xf32, #tpu.memory_space<vmem>>, vector<2x1xf32>
    tpu.vector_store %arg7[%c0_21, %c0_22], %49 {strides = array<i32>} : memref<2x1xf32, #tpu.memory_space<vmem>>, vector<2x1xf32>,
    return
  }
  func.func @transform_0(%arg0: i32) -> (i32, i32) {
    %c0_i32 = arith.constant 0 : i32
    %c0_i32_0 = arith.constant 0 : i32
    return %arg0, %c0_i32 : i32, i32
  }
  func.func @transform_1(%arg0: i32) -> (i32, i32) {
    %c0_i32 = arith.constant 0 : i32
    %c0_i32_0 = arith.constant 0 : i32
    %c0_i32_1 = arith.constant 0 : i32
    return %c0_i32, %c0_i32_0 : i32, i32
  }
  func.func @transform_2(%arg0: i32) -> (i32, i32) {
    %c0_i32 = arith.constant 0 : i32
    %c0_i32_0 = arith.constant 0 : i32
    %c0_i32_1 = arith.constant 0 : i32
    return %c0_i32, %c0_i32_0 : i32, i32
  }
  func.func @transform_3(%arg0: i32) -> (i32, i32) {
    %c0_i32 = arith.constant 0 : i32
    %c0_i32_0 = arith.constant 0 : i32
    %c0_i32_1 = arith.constant 0 : i32
    return %c0_i32, %c0_i32_0 : i32, i32
  }
  func.func @transform_4(%arg0: i32) -> (i32, i32) {
    %c0_i32 = arith.constant 0 : i32
    %c0_i32_0 = arith.constant 0 : i32
    %c0_i32_1 = arith.constant 0 : i32
    return %c0_i32, %c0_i32_0 : i32, i32
  }
  func.func @transform_5(%arg0: i32) -> (i32, i32) {
    %c0_i32 = arith.constant 0 : i32
    %c0_i32_0 = arith.constant 0 : i32
    %c0_i32_1 = arith.constant 0 : i32
    return %c0_i32, %c0_i32_0 : i32, i32
  }
  func.func @transform_6(%arg0: i32) -> (i32, i32) {
    %c0_i32 = arith.constant 0 : i32
    %c0_i32_0 = arith.constant 0 : i32
    return %arg0, %c0_i32 : i32, i32
  }
}

</mosaic_0001>

<llo_original>
// kernel: tpu_custom_call.1
$region0: #{tpu_custom_call.1}
  #allocation0 [shape = 'u32[]', space=smem, size = 0x4, offset = 0x4, fixed_abs, tag = 'smem constant byte address 0x4 - core index']
  #allocation1 [shape = 'u32[144,128]{1,0:T(1,128)}', space=vmem, size = 0x12000, scoped, tag = 'internal scratch']
  %s0 = inlined_call_operand.hbm [shape: f32[2,128], index: 0, kind: input, shape index: {}]
  %s1 = inlined_call_operand.hbm [shape: bf16[128,128], index: 1, kind: input, shape index: {}]
  %s2 = inlined_call_operand.hbm [shape: bf16[32,32], index: 2, kind: input, shape index: {}]
  %s3 = inlined_call_operand.vmem [shape: bf16[8,8], index: 3, kind: input, shape index: {}]
  %s4 = inlined_call_operand.vmem [shape: bf16[8,1], index: 4, kind: input, shape index: {}]
  %s5 = inlined_call_operand.vmem [shape: f32[4,128], index: 5, kind: input, shape index: {}]
  %s6 = inlined_call_operand.vmem [shape: f32[2,1], index: 6, kind: output, shape index: {}]
  %s7 = sld [smem:[#allocation0]]
  $region46: #{tpu_custom_call.1} parent=0
    _
  %s9 = ssub.s32 1, %s7
  %s10 = scalar_select 0, %s9, %s7
  $region1: #{tpu_custom_call.1} parent=0
    #allocation2 [shape = 'u8[1024]{0}', space=vmem, size = 0x400, scoped, tag = 'input window, operand 0, single buffered']
    #allocation3 [shape = 's32[1]{0}', space=sflag, size = 0x4, scoped, tag = 'scoped memory for tpu_custom_call.1']
    #allocation4 [shape = 'u8[32768]{0}', space=vmem, size = 0x8000, scoped, tag = 'input window, operand 1, single buffered']
    #allocation5 [shape = 's32[1]{0}', space=sflag, size = 0x4, scoped, tag = 'scoped memory for tpu_custom_call.1']
    #allocation6 [shape = 'u8[8192]{0}', space=vmem, size = 0x2000, scoped, tag = 'input window, operand 2, single buffered']
    %11 = vsyncpa [#allocation3], 0
    %12 = vsyncpa [#allocation5], 0
    // Predicated region
    $region2: #{tpu_custom_call.1} parent=1 // pred_check
      _
    $region3: #{tpu_custom_call.1} parent=1 // pred_check_branch
      %14 = sbr.rel (0) target = $region5
    $region4: #{tpu_custom_call.1} parent=1 // pred_region
      %s16 = ssub.s32 32, 32
      %17 = vsyncadd [#allocation3], %s16
      %s19 = sshll.u32 [#allocation2], 4
      %s20 = int_to_ptr.vmem [resolvable:$true] %s19
      %22 = dma.hbm_to_vmem [thread:$0]  %s0, 32, %s20, [#allocation3]
    $region5: #{tpu_custom_call.1} parent=1 // pred_fallthru
      _
    // Predicated region
    $region6: #{tpu_custom_call.1} parent=1 // pred_check
      _
    $region7: #{tpu_custom_call.1} parent=1 // pred_check_branch
      %24 = sbr.rel (0) target = $region9
    $region8: #{tpu_custom_call.1} parent=1 // pred_region
      %s26 = ssub.s32 1024, 1024
      %27 = vsyncadd [#allocation5], %s26
      %s28 = sshll.u32 [#allocation4], 4
      %s29 = int_to_ptr.vmem [resolvable:$true] %s28
      %34 = dma.hbm_to_vmem [thread:$0]  %s1, 1024, %s29, [#allocation5], 64, 64, 4
    $region9: #{tpu_custom_call.1} parent=1 // pred_fallthru
      _
    // Predicated region
    $region10: #{tpu_custom_call.1} parent=1 // pred_check
      _
    $region11: #{tpu_custom_call.1} parent=1 // pred_check_branch
      %36 = sbr.rel (0) target = $region13
    $region12: #{tpu_custom_call.1} parent=1 // pred_region
      %s38 = ssub.s32 256, 256
      %39 = vsyncadd [#allocation5], %s38
      %s40 = sshll.u32 [#allocation6], 4
      %s41 = int_to_ptr.vmem [resolvable:$true] %s40
      %46 = dma.hbm_to_vmem [thread:$0]  %s2, 256, %s41, [#allocation5], 64, 64, 4
    $region13: #{tpu_custom_call.1} parent=1 // pred_fallthru
      _
    // Predicated region
    $region14: #{tpu_custom_call.1} parent=1 // pred_check
      _
    $region15: #{tpu_custom_call.1} parent=1 // pred_check_branch
      %48 = sbr.rel (0) target = $region17
    $region16: #{tpu_custom_call.1} parent=1 // pred_region
      _
    $region17: #{tpu_custom_call.1} parent=1 // pred_fallthru
      _
    // Predicated region
    $region18: #{tpu_custom_call.1} parent=1 // pred_check
      _
    $region19: #{tpu_custom_call.1} parent=1 // pred_check_branch
      %50 = sbr.rel (0) target = $region21
    $region20: #{tpu_custom_call.1} parent=1 // pred_region
      _
    $region21: #{tpu_custom_call.1} parent=1 // pred_fallthru
      _
    // Predicated region
    $region22: #{tpu_custom_call.1} parent=1 // pred_check
      _
    $region23: #{tpu_custom_call.1} parent=1 // pred_check_branch
      %52 = sbr.rel (0) target = $region25
    $region24: #{tpu_custom_call.1} parent=1 // pred_region
      _
    $region25: #{tpu_custom_call.1} parent=1 // pred_fallthru
      _
    // Predicated region
    $region26: #{tpu_custom_call.1} parent=1 // pred_check
      _
    $region27: #{tpu_custom_call.1} parent=1 // pred_check_branch
      %54 = sbr.rel (0) target = $region29
    $region28: #{tpu_custom_call.1} parent=1 // pred_region
      %55 = dma.done [#allocation3], 32
    $region29: #{tpu_custom_call.1} parent=1 // pred_fallthru
      _
    // Predicated region
    $region30: #{tpu_custom_call.1} parent=1 // pred_check
      _
    $region31: #{tpu_custom_call.1} parent=1 // pred_check_branch
      %57 = sbr.rel (0) target = $region33
    $region32: #{tpu_custom_call.1} parent=1 // pred_region
      %58 = dma.done [#allocation5], 1024
    $region33: #{tpu_custom_call.1} parent=1 // pred_fallthru
      _
    // Predicated region
    $region34: #{tpu_custom_call.1} parent=1 // pred_check
      _
    $region35: #{tpu_custom_call.1} parent=1 // pred_check_branch
      %60 = sbr.rel (0) target = $region37
    $region36: #{tpu_custom_call.1} parent=1 // pred_region
      %61 = dma.done [#allocation5], 256
    $region37: #{tpu_custom_call.1} parent=1 // pred_fallthru
      _
    %v63 = vld [vmem:[#allocation2] sm:$0x3]
    %v64 = vpack.c.bf16 %v63, %v63
    %v65 = vld [vmem:[#allocation4] sm:$0xf]
    %v66 = vld [vmem:[#allocation4 + $0x4] sm:$0xf]
    %v67 = vld [vmem:[#allocation4 + $0x8] sm:$0xf]
    %v68 = vld [vmem:[#allocation4 + $0xc] sm:$0xf]
    %v69 = vld [vmem:[#allocation4 + $0x10] sm:$0xf]
    %v70 = vld [vmem:[#allocation4 + $0x14] sm:$0xf]
    %v71 = vld [vmem:[#allocation4 + $0x18] sm:$0xf]
    %v72 = vld [vmem:[#allocation4 + $0x1c] sm:$0xf]
    %v73 = vld [vmem:[#allocation4 + $0x20] sm:$0xf]
    %v74 = vld [vmem:[#allocation4 + $0x24] sm:$0xf]
    %v75 = vld [vmem:[#allocation4 + $0x28] sm:$0xf]
    %v76 = vld [vmem:[#allocation4 + $0x2c] sm:$0xf]
    %v77 = vld [vmem:[#allocation4 + $0x30] sm:$0xf]
    %v78 = vld [vmem:[#allocation4 + $0x34] sm:$0xf]
    %v79 = vld [vmem:[#allocation4 + $0x38] sm:$0xf]
    %v80 = vld [vmem:[#allocation4 + $0x3c] sm:$0xf]
    %v81 = vld [vmem:[%s5] sm:$0x1]
    %v82 = vlaneseq
    %v83 = vshrl.u32 %v82, 7
    %v84 = vsub.s32 0, %v83
    %v85 = vrot.slane %v81, %v84
    %v102 = vunpack.c.l.b16 %v65
    %v103 = vunpack.c.l.b16 %v66
    %v104 = vunpack.c.l.b16 %v67
    %v105 = vunpack.c.l.b16 %v68
    %v106 = vunpack.c.l.b16 %v69
    %v107 = vunpack.c.l.b16 %v70
    %v108 = vunpack.c.l.b16 %v71
    %v109 = vunpack.c.l.b16 %v72
    %v110 = vunpack.c.l.b16 %v73
    %v111 = vunpack.c.l.b16 %v74
    %v112 = vunpack.c.l.b16 %v75
    %v113 = vunpack.c.l.b16 %v76
    %v114 = vunpack.c.l.b16 %v77
    %v115 = vunpack.c.l.b16 %v78
    %v116 = vunpack.c.l.b16 %v79
    %v117 = vunpack.c.l.b16 %v80
    %v118 = vpack.c.b16 %v103, %v102
    %v119 = vpack.c.b16 %v105, %v104
    %v120 = vpack.c.b16 %v107, %v106
    %v121 = vpack.c.b16 %v109, %v108
    %v122 = vpack.c.b16 %v111, %v110
    %v123 = vpack.c.b16 %v113, %v112
    %v124 = vpack.c.b16 %v115, %v114
    %v125 = vpack.c.b16 %v117, %v116
    %134 = vmatprep.subr.bf16.mxu0 0
    %135 = vmatpush1.bf16.msra.mxu0 %v118
    %136 = vmatprep.subr.bf16.mxu0 0
    %137 = vmatpush1.bf16.msra.mxu0 %v119
    %138 = vmatprep.subr.bf16.mxu0 0
    %139 = vmatpush1.bf16.msra.mxu0 %v120
    %140 = vmatprep.subr.bf16.mxu0 0
    %141 = vmatpush1.bf16.msra.mxu0 %v121
    %142 = vmatprep.subr.bf16.mxu0 0
    %143 = vmatpush1.bf16.msra.mxu0 %v122
    %144 = vmatprep.subr.bf16.mxu0 0
    %145 = vmatpush1.bf16.msra.mxu0 %v123
    %146 = vmatprep.subr.bf16.mxu0 0
    %147 = vmatpush1.bf16.msra.mxu0 %v124
    %148 = vmatprep.subr.bf16.mxu0 0
    %149 = vmatpush1.bf16.msra.mxu0 %v125
    %150 = vmatprep.subr.bf16.mxu0 0
    %151 = vmatpush1.bf16.msra.mxu0 0
    %152 = vmatprep.subr.bf16.mxu0 0
    %153 = vmatpush1.bf16.msra.mxu0 0
    %154 = vmatprep.subr.bf16.mxu0 0
    %155 = vmatpush1.bf16.msra.mxu0 0
    %156 = vmatprep.subr.bf16.mxu0 0
    %157 = vmatpush1.bf16.msra.mxu0 0
    %158 = vmatprep.subr.bf16.mxu0 0
    %159 = vmatpush1.bf16.msra.mxu0 0
    %160 = vmatprep.subr.bf16.mxu0 0
    %161 = vmatpush1.bf16.msra.mxu0 0
    %162 = vmatprep.subr.bf16.mxu0 0
    %163 = vmatpush1.bf16.msra.mxu0 0
    %164 = vmatprep.subr.bf16.mxu0 0
    %165 = vmatpush1.bf16.msra.mxu0 0
    %166 = vmatprep.mubr.bf16.mxu0 0
    %167 = vmatmul.mubr.bf16.gmra.mrb[0].mxu0 %v64
    %v168 = vpop.f32.mrb[0].mxu0
    %v169 = vadd.f32 %v85, %v168
    %v170 = vpop.f32.mrb[0].mxu0
    %v171 = vpop.f32.mrb[0].mxu0
    %v172 = vpop.f32.mrb[0].mxu0
    %173 = vdwg.mxu0
    %v174 = vmax.f32 %v169, 0.0
    %176 = vrot.lane.b32.xlu0 %v174, 96
    %v177 = vpop.permute.xlu0 %176
    %v179 = vmax.f32 %v174, %v177
    %181 = vrot.lane.b32.xlu0 %v179, 64
    %v182 = vpop.permute.xlu0 %181
    %v184 = vmax.f32 %v179, %v182
    %v185 = vpack.c.bf16 %v184, %v184
    %v186 = vld [vmem:[#allocation6] sm:$0xf]
    %v187 = vld [vmem:[#allocation6 + $0x4] sm:$0xf]
    %v188 = vld [vmem:[#allocation6 + $0x8] sm:$0xf]
    %v189 = vld [vmem:[#allocation6 + $0xc] sm:$0xf]
    %v190 = vld [vmem:[%s5 + $0x1] sm:$0x1]
    %v191 = vlaneseq
    %v192 = vshrl.u32 %v191, 7
    %v193 = vsub.s32 0, %v192
    %v194 = vrot.slane %v190, %v193
    %v199 = vunpack.c.l.b16 %v186
    %v200 = vunpack.c.l.b16 %v187
    %v201 = vunpack.c.l.b16 %v188
    %v202 = vunpack.c.l.b16 %v189
    %v203 = vpack.c.b16 %v200, %v199
    %v204 = vpack.c.b16 %v202, %v201
    %vm207 = vcmask 261120
    %v209 = vsel %vm207, %v185, 0
    %211 = vmatprep.subr.bf16.mxu0 0
    %212 = vmatpush1.bf16.msra.mxu0 %v203
    %213 = vmatprep.subr.bf16.mxu0 0
    %214 = vmatpush1.bf16.msra.mxu0 %v204
    %215 = vmatprep.subr.bf16.mxu0 0
    %216 = vmatpush1.bf16.msra.mxu0 0
    %217 = vmatprep.subr.bf16.mxu0 0
    %218 = vmatpush1.bf16.msra.mxu0 0
    %219 = vmatprep.subr.bf16.mxu0 0
    %220 = vmatpush1.bf16.msra.mxu0 0
    %221 = vmatprep.subr.bf16.mxu0 0
    %222 = vmatpush1.bf16.msra.mxu0 0
    %223 = vmatprep.subr.bf16.mxu0 0
    %224 = vmatpush1.bf16.msra.mxu0 0
    %225 = vmatprep.subr.bf16.mxu0 0
    %226 = vmatpush1.bf16.msra.mxu0 0
    %227 = vmatprep.subr.bf16.mxu0 0
    %228 = vmatpush1.bf16.msra.mxu0 0
    %229 = vmatprep.subr.bf16.mxu0 0
    %230 = vmatpush1.bf16.msra.mxu0 0
    %231 = vmatprep.subr.bf16.mxu0 0
    %232 = vmatpush1.bf16.msra.mxu0 0
    %233 = vmatprep.subr.bf16.mxu0 0
    %234 = vmatpush1.bf16.msra.mxu0 0
    %235 = vmatprep.subr.bf16.mxu0 0
    %236 = vmatpush1.bf16.msra.mxu0 0
    %237 = vmatprep.subr.bf16.mxu0 0
    %238 = vmatpush1.bf16.msra.mxu0 0
    %239 = vmatprep.subr.bf16.mxu0 0
    %240 = vmatpush1.bf16.msra.mxu0 0
    %241 = vmatprep.subr.bf16.mxu0 0
    %242 = vmatpush1.bf16.msra.mxu0 0
    %243 = vmatprep.mubr.bf16.mxu0 0
    %244 = vmatmul.mubr.bf16.gmra.mrb[0].mxu0 %v209
    %v245 = vpop.f32.mrb[0].mxu0
    %v246 = vadd.f32 %v194, %v245
    %v247 = vpop.f32.mrb[0].mxu0
    %v248 = vpop.f32.mrb[0].mxu0
    %v249 = vpop.f32.mrb[0].mxu0
    %250 = vdwg.mxu0
    %v251 = vmax.f32 %v246, 0.0
    %253 = vrot.lane.b32.xlu0 %v251, 120
    %v254 = vpop.permute.xlu0 %253
    %v256 = vmax.f32 %v251, %v254
    %258 = vrot.lane.b32.xlu0 %v256, 112
    %v259 = vpop.permute.xlu0 %258
    %v261 = vmax.f32 %v256, %v259
    %v262 = vpack.c.bf16 %v261, %v261
    %v263 = vld [vmem:[%s3] sm:$0xf]
    %v264 = vld [vmem:[%s5 + $0x2] sm:$0x1]
    %v265 = vlaneseq
    %v266 = vshrl.u32 %v265, 7
    %v267 = vsub.s32 0, %v266
    %v268 = vrot.slane %v264, %v267
    %vm269 = vcmask 64512
    %v271 = vsel %vm269, %v262, 0
    %vm273 = vcmask 1043456
    %v275 = vsel %vm273, %v263, 0
    %277 = vmatprep.subr.bf16.mxu0 0
    %278 = vmatpush1.bf16.msra.mxu0 %v275
    %279 = vmatprep.subr.bf16.mxu0 0
    %280 = vmatpush1.bf16.msra.mxu0 0
    %281 = vmatprep.subr.bf16.mxu0 0
    %282 = vmatpush1.bf16.msra.mxu0 0
    %283 = vmatprep.subr.bf16.mxu0 0
    %284 = vmatpush1.bf16.msra.mxu0 0
    %285 = vmatprep.subr.bf16.mxu0 0
    %286 = vmatpush1.bf16.msra.mxu0 0
    %287 = vmatprep.subr.bf16.mxu0 0
    %288 = vmatpush1.bf16.msra.mxu0 0
    %289 = vmatprep.subr.bf16.mxu0 0
    %290 = vmatpush1.bf16.msra.mxu0 0
    %291 = vmatprep.subr.bf16.mxu0 0
    %292 = vmatpush1.bf16.msra.mxu0 0
    %293 = vmatprep.subr.bf16.mxu0 0
    %294 = vmatpush1.bf16.msra.mxu0 0
    %295 = vmatprep.subr.bf16.mxu0 0
    %296 = vmatpush1.bf16.msra.mxu0 0
    %297 = vmatprep.subr.bf16.mxu0 0
    %298 = vmatpush1.bf16.msra.mxu0 0
    %299 = vmatprep.subr.bf16.mxu0 0
    %300 = vmatpush1.bf16.msra.mxu0 0
    %301 = vmatprep.subr.bf16.mxu0 0
    %302 = vmatpush1.bf16.msra.mxu0 0
    %303 = vmatprep.subr.bf16.mxu0 0
    %304 = vmatpush1.bf16.msra.mxu0 0
    %305 = vmatprep.subr.bf16.mxu0 0
    %306 = vmatpush1.bf16.msra.mxu0 0
    %307 = vmatprep.subr.bf16.mxu0 0
    %308 = vmatpush1.bf16.msra.mxu0 0
    %309 = vmatprep.mubr.bf16.mxu0 0
    %310 = vmatmul.mubr.bf16.gmra.mrb[0].mxu0 %v271
    %v311 = vpop.f32.mrb[0].mxu0
    %v312 = vadd.f32 %v268, %v311
    %v313 = vpop.f32.mrb[0].mxu0
    %v314 = vpop.f32.mrb[0].mxu0
    %v315 = vpop.f32.mrb[0].mxu0
    %316 = vdwg.mxu0
    %v317 = vmax.f32 %v312, 0.0
    %v318 = vpack.c.bf16 %v317, %v317
    %v319 = vld [vmem:[%s4] sm:$0xf]
    %v320 = vld [vmem:[%s5 + $0x3] sm:$0x1]
    %v321 = vlaneseq
    %v322 = vshrl.u32 %v321, 7
    %v323 = vsub.s32 0, %v322
    %v324 = vrot.slane %v320, %v323
    %v326 = vsel %vm269, %v318, 0
    %v329 = vsel %vm273, %v319, 0
    %331 = vmatprep.subr.bf16.mxu0 0
    %332 = vmatpush1.bf16.msra.mxu0 %v329
    %333 = vmatprep.subr.bf16.mxu0 0
    %334 = vmatpush1.bf16.msra.mxu0 0
    %335 = vmatprep.subr.bf16.mxu0 0
    %336 = vmatpush1.bf16.msra.mxu0 0
    %337 = vmatprep.subr.bf16.mxu0 0
    %338 = vmatpush1.bf16.msra.mxu0 0
    %339 = vmatprep.subr.bf16.mxu0 0
    %340 = vmatpush1.bf16.msra.mxu0 0
    %341 = vmatprep.subr.bf16.mxu0 0
    %342 = vmatpush1.bf16.msra.mxu0 0
    %343 = vmatprep.subr.bf16.mxu0 0
    %344 = vmatpush1.bf16.msra.mxu0 0
    %345 = vmatprep.subr.bf16.mxu0 0
    %346 = vmatpush1.bf16.msra.mxu0 0
    %347 = vmatprep.subr.bf16.mxu0 0
    %348 = vmatpush1.bf16.msra.mxu0 0
    %349 = vmatprep.subr.bf16.mxu0 0
    %350 = vmatpush1.bf16.msra.mxu0 0
    %351 = vmatprep.subr.bf16.mxu0 0
    %352 = vmatpush1.bf16.msra.mxu0 0
    %353 = vmatprep.subr.bf16.mxu0 0
    %354 = vmatpush1.bf16.msra.mxu0 0
    %355 = vmatprep.subr.bf16.mxu0 0
    %356 = vmatpush1.bf16.msra.mxu0 0
    %357 = vmatprep.subr.bf16.mxu0 0
    %358 = vmatpush1.bf16.msra.mxu0 0
    %359 = vmatprep.subr.bf16.mxu0 0
    %360 = vmatpush1.bf16.msra.mxu0 0
    %361 = vmatprep.subr.bf16.mxu0 0
    %362 = vmatpush1.bf16.msra.mxu0 0
    %363 = vmatprep.mubr.bf16.mxu0 0
    %364 = vmatmul.mubr.bf16.gmra.mrb[0].mxu0 %v326
    %v365 = vpop.f32.mrb[0].mxu0
    %v366 = vadd.f32 %v324, %v365
    %v367 = vpop.f32.mrb[0].mxu0
    %v368 = vpop.f32.mrb[0].mxu0
    %v369 = vpop.f32.mrb[0].mxu0
    %370 = vdwg.mxu0
    %v371 = vxor.u32 %v366, 2147483648
    %v372 = vmul.f32 %v371, 1.442695
    %v373 = vpow.pop %v372
    %v374 = vadd.f32 %v373, 1.0
    %v375 = vrcp.pop %v374
    %v376 = vmul.f32 1.0, %v375
    %vm377 = vcmask 1024
    %378 = vst.msk [vmem:[%s6] sm:$0x3] %vm377, %v376
    // Predicated region
    $region38: #{tpu_custom_call.1} parent=1 // pred_check
      _
    $region39: #{tpu_custom_call.1} parent=1 // pred_check_branch
      %380 = sbr.rel (0) target = $region41
    $region40: #{tpu_custom_call.1} parent=1 // pred_region
      _
    $region41: #{tpu_custom_call.1} parent=1 // pred_fallthru
      _
    // Predicated region
    $region42: #{tpu_custom_call.1} parent=1 // pred_check
      _
    $region43: #{tpu_custom_call.1} parent=1 // pred_check_branch
      %382 = sbr.rel (0) target = $region45
    $region44: #{tpu_custom_call.1} parent=1 // pred_region
      _
    $region45: #{tpu_custom_call.1} parent=1 // pred_fallthru
      _
    %383 = vsyncpa [#allocation3], 1
    %384 = vsyncpa [#allocation5], 1

</llo_original>
